<compile_context>
chip_gen: v7x
topology: tpu7x:2x2x1
jax: 0.10.0
libtpu: 0.0.40
codegen_flags: <defaults>
</compile_context>

<pallas_src>
import functools

import jax
import jax.numpy as jnp
from jax.experimental import pallas as pl
from jax.experimental.pallas import tpu as pltpu

LANE = 128        # vreg lane width: batch maps onto lanes
SUBLANE = 8       # second-minor granularity
TILE_ROWS = 1024  # rows-of-128 per grid step (=131072 batch elems, ~1 MiB input/block)


def _round_up(n, m):
    return ((n + m - 1) // m) * m


def simplenet_kernel(params_ref, x_ref, o_ref):
    # params_ref (SMEM, f32[13]): [w1 row-major (2*3), b1 (3), w2 (3), b2 (1)]
    #   w1[i, j] -> params[i*3 + j], b1[j] -> params[6 + j],
    #   w2[j, 0] -> params[9 + j],   b2    -> params[12]
    # x_ref (VMEM): (2, tile_rows, 128) f32 feature-major batch planes
    # o_ref (VMEM): (tile_rows, 128) f32 output plane
    x0 = x_ref[0]          # (tile_rows, 128) -- full lane-dense plane
    x1 = x_ref[1]
    # Hidden layer (3 units) + ReLU: broadcasted VPU FMAs with SMEM-scalar weights.
    h0 = jnp.maximum(x0 * params_ref[0] + x1 * params_ref[3] + params_ref[6], 0.0)
    h1 = jnp.maximum(x0 * params_ref[1] + x1 * params_ref[4] + params_ref[7], 0.0)
    h2 = jnp.maximum(x0 * params_ref[2] + x1 * params_ref[5] + params_ref[8], 0.0)
    # Output layer (1 unit), written as a full unmasked lane-dense plane.
    o_ref[...] = (h0 * params_ref[9] + h1 * params_ref[10] + h2 * params_ref[11]
                  + params_ref[12])


def pack_params(w1, b1, w2, b2):
    """One-time (init-time) packing of all weights/biases into a flat f32[13]."""
    return jnp.concatenate([
        w1.astype(jnp.float32).reshape(-1),   # 6
        b1.astype(jnp.float32).reshape(-1),   # 3
        w2.astype(jnp.float32).reshape(-1),   # 3
        b2.astype(jnp.float32).reshape(-1),   # 1
    ])


@functools.partial(jax.jit, static_argnames=("tile_rows",))
def simplenet_forward(x, params, tile_rows=TILE_ROWS):
    """x: (B, 2) float, params: f32[13] from pack_params. Returns (B, 1) f32."""
    B = x.shape[0]
    rows_needed = -(-B // LANE)                              # ceil(B / 128)
    tr = min(tile_rows, _round_up(rows_needed, SUBLANE))     # block rows (mult of 8)
    rows = _round_up(rows_needed, tr)                        # total rows (mult of tr)
    Bp = rows * LANE

    x_p = x.astype(jnp.float32)
    if Bp != B:  # trace-time decision; no pad op emitted when already aligned
        x_p = jnp.pad(x_p, ((0, Bp - B), (0, 0)))
    # Layout plumbing in the wrapper: feature-major, lane-dense batch planes.
    x_fm = x_p.T.reshape(2, rows, LANE)

    out_plane = pl.pallas_call(
        simplenet_kernel,
        out_shape=jax.ShapeDtypeStruct((rows, LANE), jnp.float32),
        grid=(rows // tr,),
        in_specs=[
            # Packed scalar params: full array, resident in SMEM across the grid.
            pl.BlockSpec(memory_space=pltpu.MemorySpace.SMEM),
            # Lane-dense input planes, tiled along the batch-row axis.
            pl.BlockSpec((2, tr, LANE), lambda i: (0, i, 0)),
        ],
        out_specs=pl.BlockSpec((tr, LANE), lambda i: (i, 0)),
        compiler_params=pltpu.CompilerParams(
            dimension_semantics=("parallel",),
        ),
    )(params, x_fm)

    # Undo the layout plumbing; padded rows computed garbage and are sliced off.
    return out_plane.reshape(Bp, 1)[:B]


if __name__ == "__main__":
    key = jax.random.PRNGKey(0)
    kx, kx2, k1, k2, k3, k4 = jax.random.split(key, 6)

    B, F_IN, HID, F_OUT = 8, 2, 3, 1

    # Deterministic PyTorch-style init: uniform(-1/sqrt(fan_in), 1/sqrt(fan_in)).
    bound1 = 1.0 / jnp.sqrt(F_IN)
    bound2 = 1.0 / jnp.sqrt(HID)
    w1 = jax.random.uniform(k1, (F_IN, HID), jnp.float32, -bound1, bound1)   # (in, out)
    b1 = jax.random.uniform(k2, (HID,), jnp.float32, -bound1, bound1)
    w2 = jax.random.uniform(k3, (HID, F_OUT), jnp.float32, -bound2, bound2)  # (in, out)
    b2 = jax.random.uniform(k4, (F_OUT,), jnp.float32, -bound2, bound2)

    params = pack_params(w1, b1, w2, b2)   # hoisted out of the per-call hot path

    def ref_fn(xv):
        return jnp.maximum(xv @ w1 + b1, 0.0) @ w2 + b2

    # Small demo batch (launch-overhead regime; correctness check).
    x = jax.random.normal(kx, (B, F_IN), jnp.float32)
    out = simplenet_forward(x, params)
    jax.block_until_ready(out)
    assert out.shape == (B, F_OUT)
    assert jnp.allclose(out, ref_fn(x), atol=1e-5), "mismatch vs reference (B=8)"

    # Slightly larger batch with a small tile to exercise the multi-step grid,
    # full-tile padding, and the pipelined path.
    B2 = 4096
    x2 = jax.random.normal(kx2, (B2, F_IN), jnp.float32)
    out2 = simplenet_forward(x2, params, tile_rows=8)   # grid=(4,)
    jax.block_until_ready(out2)
    assert out2.shape == (B2, F_OUT)
    assert jnp.allclose(out2, ref_fn(x2), atol=1e-5), "mismatch vs reference (B=4096)"

    print("KERNEL_OK")
</pallas_src>

<mosaic_0001>
module attributes {stable_mosaic.version = 11 : i64} {
  func.func @simplenet_kernel(%arg0: i32, %arg1: memref<13xf32, #tpu.memory_space<smem>>, %arg2: memref<2x8x128xf32, #tpu.memory_space<vmem>>, %arg3: memref<8x128xf32, #tpu.memory_space<vmem>>) attributes {dimension_semantics = [#tpu.dimension_semantics<parallel>], iteration_bounds = array<i64: 1>, scalar_prefetch = 0 : i64, scratch_operands = 0 : i64, tpu.core_type = #tpu.core_type<tc>, window_params = [{transform_indices = @transform_0, window_bounds = array<i64: 13>}, {transform_indices = @transform_1, window_bounds = array<i64: 2, 8, 128>}, {transform_indices = @transform_2, window_bounds = array<i64: 8, 128>}]} {
    %c0 = arith.constant 0 : index
    %c0_0 = arith.constant 0 : index
    %c0_1 = arith.constant 0 : index
    %0 = vector.load %arg2[%c0, %c0_0, %c0_1] : memref<2x8x128xf32, #tpu.memory_space<vmem>>, vector<1x8x128xf32>
    %1 = vector.shape_cast %0 : vector<1x8x128xf32> to vector<8x128xf32>
    %c1 = arith.constant 1 : index
    %c0_2 = arith.constant 0 : index
    %c0_3 = arith.constant 0 : index
    %2 = vector.load %arg2[%c1, %c0_2, %c0_3] : memref<2x8x128xf32, #tpu.memory_space<vmem>>, vector<1x8x128xf32>
    %3 = vector.shape_cast %2 : vector<1x8x128xf32> to vector<8x128xf32>
    %c0_4 = arith.constant 0 : index
    %4 = memref.load %arg1[%c0_4] : memref<13xf32, #tpu.memory_space<smem>>
    %5 = vector.broadcast %4 : f32 to vector<8x128xf32>
    %6 = arith.mulf %1, %5 : vector<8x128xf32>
    %c3 = arith.constant 3 : index
    %7 = memref.load %arg1[%c3] : memref<13xf32, #tpu.memory_space<smem>>
    %8 = vector.broadcast %7 : f32 to vector<8x128xf32>
    %9 = arith.mulf %3, %8 : vector<8x128xf32>
    %10 = arith.addf %6, %9 : vector<8x128xf32>
    %c6 = arith.constant 6 : index
    %11 = memref.load %arg1[%c6] : memref<13xf32, #tpu.memory_space<smem>>
    %12 = vector.broadcast %11 : f32 to vector<8x128xf32>
    %13 = arith.addf %10, %12 : vector<8x128xf32>
    %cst = arith.constant 0.000000e+00 : f32
    %14 = vector.broadcast %cst : f32 to vector<8x128xf32>
    %15 = arith.maximumf %13, %14 : vector<8x128xf32>
    %c1_5 = arith.constant 1 : index
    %16 = memref.load %arg1[%c1_5] : memref<13xf32, #tpu.memory_space<smem>>
    %17 = vector.broadcast %16 : f32 to vector<8x128xf32>
    %18 = arith.mulf %1, %17 : vector<8x128xf32>
    %c4 = arith.constant 4 : index
    %19 = memref.load %arg1[%c4] : memref<13xf32, #tpu.memory_space<smem>>
    %20 = vector.broadcast %19 : f32 to vector<8x128xf32>
    %21 = arith.mulf %3, %20 : vector<8x128xf32>
    %22 = arith.addf %18, %21 : vector<8x128xf32>
    %c7 = arith.constant 7 : index
    %23 = memref.load %arg1[%c7] : memref<13xf32, #tpu.memory_space<smem>>
    %24 = vector.broadcast %23 : f32 to vector<8x128xf32>
    %25 = arith.addf %22, %24 : vector<8x128xf32>
    %cst_6 = arith.constant 0.000000e+00 : f32
    %26 = vector.broadcast %cst_6 : f32 to vector<8x128xf32>
    %27 = arith.maximumf %25, %26 : vector<8x128xf32>
    %c2 = arith.constant 2 : index
    %28 = memref.load %arg1[%c2] : memref<13xf32, #tpu.memory_space<smem>>
    %29 = vector.broadcast %28 : f32 to vector<8x128xf32>
    %30 = arith.mulf %1, %29 : vector<8x128xf32>
    %c5 = arith.constant 5 : index
    %31 = memref.load %arg1[%c5] : memref<13xf32, #tpu.memory_space<smem>>
    %32 = vector.broadcast %31 : f32 to vector<8x128xf32>
    %33 = arith.mulf %3, %32 : vector<8x128xf32>
    %34 = arith.addf %30, %33 : vector<8x128xf32>
    %c8 = arith.constant 8 : index
    %35 = memref.load %arg1[%c8] : memref<13xf32, #tpu.memory_space<smem>>
    %36 = vector.broadcast %35 : f32 to vector<8x128xf32>
    %37 = arith.addf %34, %36 : vector<8x128xf32>
    %cst_7 = arith.constant 0.000000e+00 : f32
    %38 = vector.broadcast %cst_7 : f32 to vector<8x128xf32>
    %39 = arith.maximumf %37, %38 : vector<8x128xf32>
    %c9 = arith.constant 9 : index
    %40 = memref.load %arg1[%c9] : memref<13xf32, #tpu.memory_space<smem>>
    %41 = vector.broadcast %40 : f32 to vector<8x128xf32>
    %42 = arith.mulf %15, %41 : vector<8x128xf32>
    %c10 = arith.constant 10 : index
    %43 = memref.load %arg1[%c10] : memref<13xf32, #tpu.memory_space<smem>>
    %44 = vector.broadcast %43 : f32 to vector<8x128xf32>
    %45 = arith.mulf %27, %44 : vector<8x128xf32>
    %46 = arith.addf %42, %45 : vector<8x128xf32>
    %c11 = arith.constant 11 : index
    %47 = memref.load %arg1[%c11] : memref<13xf32, #tpu.memory_space<smem>>
    %48 = vector.broadcast %47 : f32 to vector<8x128xf32>
    %49 = arith.mulf %39, %48 : vector<8x128xf32>
    %50 = arith.addf %46, %49 : vector<8x128xf32>
    %c12 = arith.constant 12 : index
    %51 = memref.load %arg1[%c12] : memref<13xf32, #tpu.memory_space<smem>>
    %52 = vector.broadcast %51 : f32 to vector<8x128xf32>
    %53 = arith.addf %50, %52 : vector<8x128xf32>
    %c0_8 = arith.constant 0 : index
    %c0_9 = arith.constant 0 : index
    %54 = vector.load %arg3[%c0_8, %c0_9] : memref<8x128xf32, #tpu.memory_space<vmem>>, vector<8x128xf32>
    tpu.vector_store %arg3[%c0_8, %c0_9], %53 {strides = array<i32>} : memref<8x128xf32, #tpu.memory_space<vmem>>, vector<8x128xf32>,
    return
  }
  func.func @transform_0(%arg0: i32) -> i32 {
    %c0_i32 = arith.constant 0 : i32
    %c0_i32_0 = arith.constant 0 : i32
    return %c0_i32 : i32
  }
  func.func @transform_1(%arg0: i32) -> (i32, i32, i32) {
    %c0_i32 = arith.constant 0 : i32
    %c0_i32_0 = arith.constant 0 : i32
    %c0_i32_1 = arith.constant 0 : i32
    return %c0_i32, %arg0, %c0_i32_0 : i32, i32, i32
  }
  func.func @transform_2(%arg0: i32) -> (i32, i32) {
    %c0_i32 = arith.constant 0 : i32
    %c0_i32_0 = arith.constant 0 : i32
    return %arg0, %c0_i32 : i32, i32
  }
}

</mosaic_0001>

<llo_original>
// kernel: simplenet_forward.1
$region0: #{simplenet_forward.1}
  #allocation0 [shape = 'u32[]', space=smem, size = 0x4, offset = 0x4, fixed_abs, tag = 'smem constant byte address 0x4 - core index']
  #allocation1 [shape = 'u32[144,128]{1,0:T(1,128)}', space=vmem, size = 0x12000, scoped, tag = 'internal scratch']
  %s0 = inlined_call_operand.vmem [shape: f32[13], index: 0, kind: input, shape index: {}]
  %s1 = inlined_call_operand.vmem [shape: f32[2,8,128], index: 1, kind: input, shape index: {}]
  %s2 = inlined_call_operand.vmem [shape: f32[8,128], index: 2, kind: output, shape index: {}]
  %s3 = sld [smem:[#allocation0]]
  $region22: #{simplenet_forward.1} parent=0
    _
  %s5 = ssub.s32 1, %s3
  %s6 = scalar_select 0, %s5, %s3
  $region1: #{simplenet_forward.1} parent=0
    #allocation2 [shape = 'u8[512]{0}', space=smem, size = 0x200, scoped, tag = 'input window, operand 0, single buffered']
    #allocation3 [shape = 's32[1]{0}', space=sflag, size = 0x4, scoped, tag = 'scoped memory for simplenet_forward.1']
    %7 = vsyncpa [#allocation3], 0
    // Predicated region
    $region2: #{simplenet_forward.1} parent=1 // pred_check
      _
    $region3: #{simplenet_forward.1} parent=1 // pred_check_branch
      %9 = sbr.rel (0) target = $region5
    $region4: #{simplenet_forward.1} parent=1 // pred_region
      %s11 = ssub.s32 16, 16
      %12 = vsyncadd [#allocation3], %s11
      %s14 = sshll.u32 %s0, 4
      %s15 = int_to_ptr.vmem [resolvable:$true] %s14
      %17 = dma.vmem_to_smem %s15, 16, [#allocation2], [#allocation3]
    $region5: #{simplenet_forward.1} parent=1 // pred_fallthru
      _
    // Predicated region
    $region6: #{simplenet_forward.1} parent=1 // pred_check
      _
    $region7: #{simplenet_forward.1} parent=1 // pred_check_branch
      %19 = sbr.rel (0) target = $region9
    $region8: #{simplenet_forward.1} parent=1 // pred_region
      _
    $region9: #{simplenet_forward.1} parent=1 // pred_fallthru
      _
    // Predicated region
    $region10: #{simplenet_forward.1} parent=1 // pred_check
      _
    $region11: #{simplenet_forward.1} parent=1 // pred_check_branch
      %21 = sbr.rel (0) target = $region13
    $region12: #{simplenet_forward.1} parent=1 // pred_region
      %22 = dma.done [#allocation3], 16
    $region13: #{simplenet_forward.1} parent=1 // pred_fallthru
      _
    %23 = sfence
    %v24 = vld [vmem:[%s1] sm:$0xff]
    %s25 = scalar_lea.vmem %s1, 8
    %v26 = vld [vmem:[%s25] sm:$0xff]
    %s27 = sld [smem:[#allocation2]]
    %v28 = vstv %s27
    %v29 = vmul.f32 %v24, %v28
    %s30 = sld [smem:[#allocation2 + $0x3]]
    %v31 = vstv %s30
    %v32 = vmul.f32 %v26, %v31
    %v33 = vadd.f32 %v29, %v32
    %s34 = sld [smem:[#allocation2 + $0x6]]
    %v35 = vstv %s34
    %v36 = vadd.f32 %v33, %v35
    %v37 = vmax.f32 %v36, 0.0
    %s38 = sld [smem:[#allocation2 + $0x1]]
    %v39 = vstv %s38
    %v40 = vmul.f32 %v24, %v39
    %s41 = sld [smem:[#allocation2 + $0x4]]
    %v42 = vstv %s41
    %v43 = vmul.f32 %v26, %v42
    %v44 = vadd.f32 %v40, %v43
    %s45 = sld [smem:[#allocation2 + $0x7]]
    %v46 = vstv %s45
    %v47 = vadd.f32 %v44, %v46
    %v48 = vmax.f32 %v47, 0.0
    %s49 = sld [smem:[#allocation2 + $0x2]]
    %v50 = vstv %s49
    %v51 = vmul.f32 %v24, %v50
    %s52 = sld [smem:[#allocation2 + $0x5]]
    %v53 = vstv %s52
    %v54 = vmul.f32 %v26, %v53
    %v55 = vadd.f32 %v51, %v54
    %s56 = sld [smem:[#allocation2 + $0x8]]
    %v57 = vstv %s56
    %v58 = vadd.f32 %v55, %v57
    %v59 = vmax.f32 %v58, 0.0
    %s60 = sld [smem:[#allocation2 + $0x9]]
    %v61 = vstv %s60
    %v62 = vmul.f32 %v37, %v61
    %s63 = sld [smem:[#allocation2 + $0xa]]
    %v64 = vstv %s63
    %v65 = vmul.f32 %v48, %v64
    %v66 = vadd.f32 %v62, %v65
    %s67 = sld [smem:[#allocation2 + $0xb]]
    %v68 = vstv %s67
    %v69 = vmul.f32 %v59, %v68
    %v70 = vadd.f32 %v66, %v69
    %s71 = sld [smem:[#allocation2 + $0xc]]
    %v72 = vstv %s71
    %v73 = vadd.f32 %v70, %v72
    %74 = vst [vmem:[%s2] sm:$0xff] %v73
    // Predicated region
    $region14: #{simplenet_forward.1} parent=1 // pred_check
      _
    $region15: #{simplenet_forward.1} parent=1 // pred_check_branch
      %76 = sbr.rel (0) target = $region17
    $region16: #{simplenet_forward.1} parent=1 // pred_region
      _
    $region17: #{simplenet_forward.1} parent=1 // pred_fallthru
      _
    // Predicated region
    $region18: #{simplenet_forward.1} parent=1 // pred_check
      _
    $region19: #{simplenet_forward.1} parent=1 // pred_check_branch
      %78 = sbr.rel (0) target = $region21
    $region20: #{simplenet_forward.1} parent=1 // pred_region
      _
    $region21: #{simplenet_forward.1} parent=1 // pred_fallthru
      _
    %79 = vsyncpa [#allocation3], 1

</llo_original>
